<compile_context>
chip_gen: v7x
topology: tpu7x:2x2x1
jax: 0.10.0
libtpu: 0.0.40
codegen_flags: <defaults>
</compile_context>

<pallas_src>
import jax
import jax.numpy as jnp
from jax.experimental import pallas as pl
from jax.experimental.pallas import tpu as pltpu
import numpy as np

TEMPERATURE = 2.0


def _response_loss_kernel(x_ref, o_ref):
    # x_ref: [2, K, tile_cols]  (plane 0 = student logits, plane 1 = teacher)
    # classes on sublanes, samples on lanes.
    inv_t = jnp.float32(1.0 / TEMPERATURE)
    s = x_ref[0].astype(jnp.float32)                                  # [K, tc]
    t = x_ref[1].astype(jnp.float32)                                  # [K, tc]

    # Fold 1/T into the shift (max is scale-invariant for 1/T > 0).
    s_shift = (s - jnp.max(s, axis=0, keepdims=True)) * inv_t         # [K, tc]
    t_shift = (t - jnp.max(t, axis=0, keepdims=True)) * inv_t         # [K, tc]

    t_exp = jnp.exp(t_shift)                                          # [K, tc]
    s_sum = jnp.sum(jnp.exp(s_shift), axis=0, keepdims=True)          # [1, tc]
    t_sum = jnp.sum(t_exp, axis=0, keepdims=True)                     # [1, tc]
    num = jnp.sum(t_exp * (t_shift - s_shift), axis=0, keepdims=True)  # [1, tc]

    # KL per sample column, without materializing log-softmax tiles:
    #   sum_k p_t (log p_t - log p_s)
    #     = num / t_sum + log(s_sum) - log(t_sum)
    kl = (num * pl.reciprocal(t_sum, approx=False)
          + jnp.log(s_sum) - jnp.log(t_sum))                          # [1, tc]

    partial = jnp.sum(kl)                                             # scalar
    # single lane-dense store per grid step; reduced outside the kernel
    o_ref[...] = jnp.broadcast_to(partial, o_ref.shape).astype(jnp.float32)


def _round_up(n, m):
    return ((n + m - 1) // m) * m


def _vmem_capacity_bytes():
    try:
        return int(pltpu.get_tpu_info().vmem_capacity_bytes)
    except Exception:
        return 64 << 20  # conservative fallback (v7x-sized)


def _take_columns(resp, idx):
    """Column select on a single [B, C] response with static int indexes.
    Uses a strided slice (copy, not gather) for arithmetic progressions."""
    if len(idx) == 1:
        return resp[:, idx[0]:idx[0] + 1]
    step = idx[1] - idx[0]
    if step > 0 and all(b - a == step for a, b in zip(idx[:-1], idx[1:])):
        return resp[:, idx[0]:idx[-1] + 1:step]
    return jnp.take(resp, jnp.asarray(idx, dtype=jnp.int32), axis=1)


def response_loss(sresponse, tresponse, teacher_class_indexes, compute_dtype=None):
    """sresponse / tresponse: lists of [B, num_classes] arrays.
    teacher_class_indexes: static Python ints (shared class columns).
    compute_dtype: optionally cast kernel input (e.g. jnp.bfloat16) to halve
    HBM traffic; kernel math stays f32."""
    R = len(sresponse)
    B = sresponse[0].shape[0]
    idx = [int(i) for i in teacher_class_indexes]
    K = len(idx)
    N = R * B

    dtype = jnp.dtype(compute_dtype) if compute_dtype is not None \
        else jnp.dtype(sresponse[0].dtype)
    itemsize = dtype.itemsize

    # Per-generation tile budget: input block ~ capacity/8 (double-buffered by
    # Pallas -> capacity/4), leaving room for the in-kernel f32 intermediates.
    vmem_cap = _vmem_capacity_bytes()
    block_budget = vmem_cap // 8
    max_cols = max(128, (block_budget // (2 * K * itemsize)) // 128 * 128)
    tile_cols = min(max_cols, _round_up(N, 128))
    n_pad = _round_up(N, tile_cols)
    num_tiles = n_pad // tile_cols

    def build_plane(responses):
        # Slice each response at width K first (never materialize width C),
        # transpose to [K, B] and fuse the zero padding into the same concat.
        pieces = [_take_columns(r, idx).astype(dtype).T for r in responses]
        if n_pad > N:
            pieces.append(jnp.zeros((K, n_pad - N), dtype))
        return jnp.concatenate(pieces, axis=1)                        # [K, n_pad]

    x = jnp.stack([build_plane(sresponse), build_plane(tresponse)], axis=0)  # [2, K, n_pad]

    partials = pl.pallas_call(
        _response_loss_kernel,
        out_shape=jax.ShapeDtypeStruct((num_tiles, 128), jnp.float32),
        grid=(num_tiles,),
        in_specs=[pl.BlockSpec((2, K, tile_cols), lambda i: (0, 0, i))],
        out_specs=pl.BlockSpec((1, 128), lambda i: (i, 0)),
        compiler_params=pltpu.CompilerParams(
            dimension_semantics=("parallel",),
            vmem_limit_bytes=int(vmem_cap * 3 // 4)),
    )(x)

    # batchmean over B, * T^2, then / R  ==  total_sum * T^2 / (B * R)
    return jnp.sum(partials[:, 0]) * (TEMPERATURE ** 2 / (B * R))


def _reference_loss(sresponse, tresponse, teacher_class_indexes):
    idx = jnp.asarray(teacher_class_indexes, dtype=jnp.int32)
    loss = 0.0
    for s_resp, t_resp in zip(sresponse, tresponse):
        s = jnp.take(s_resp, idx, axis=1) / TEMPERATURE
        t = jnp.take(t_resp, idx, axis=1) / TEMPERATURE
        log_ps = jax.nn.log_softmax(s, axis=-1)
        p_t = jax.nn.softmax(t, axis=-1)
        log_pt = jax.nn.log_softmax(t, axis=-1)
        kl = jnp.sum(p_t * (log_pt - log_ps)) / s.shape[0]
        loss += kl * TEMPERATURE ** 2
    return loss / len(sresponse)


if __name__ == "__main__":
    key = jax.random.PRNGKey(0)
    num_responses = 3          # number of (student, teacher) output pairs
    batch = 8
    num_classes = 32
    teacher_class_indexes = list(range(0, num_classes, 2))  # 16 shared classes

    keys = jax.random.split(key, 2 * num_responses)
    sresponse = [jax.random.normal(keys[i], (batch, num_classes), jnp.float32)
                 for i in range(num_responses)]
    tresponse = [jax.random.normal(keys[num_responses + i],
                                   (batch, num_classes), jnp.float32)
                 for i in range(num_responses)]

    loss = response_loss(sresponse, tresponse, teacher_class_indexes)
    loss = jax.block_until_ready(loss)

    ref = _reference_loss(sresponse, tresponse, teacher_class_indexes)
    np.testing.assert_allclose(np.asarray(loss), np.asarray(ref),
                               rtol=2e-5, atol=2e-6)
    print("KERNEL_OK")
</pallas_src>

<mosaic_0001>
module attributes {stable_mosaic.version = 11 : i64} {
  func.func @_response_loss_kernel(%arg0: i32, %arg1: memref<2x16x128xf32, #tpu.memory_space<vmem>>, %arg2: memref<1x128xf32, #tpu.memory_space<vmem>>) attributes {dimension_semantics = [#tpu.dimension_semantics<parallel>], iteration_bounds = array<i64: 1>, scalar_prefetch = 0 : i64, scratch_operands = 0 : i64, tpu.core_type = #tpu.core_type<tc>, window_params = [{transform_indices = @transform_0, window_bounds = array<i64: 2, 16, 128>}, {transform_indices = @transform_1, window_bounds = array<i64: 1, 128>}]} {
    %c0 = arith.constant 0 : index
    %c0_0 = arith.constant 0 : index
    %c0_1 = arith.constant 0 : index
    %0 = vector.load %arg1[%c0, %c0_0, %c0_1] : memref<2x16x128xf32, #tpu.memory_space<vmem>>, vector<1x16x128xf32>
    %1 = vector.shape_cast %0 : vector<1x16x128xf32> to vector<16x128xf32>
    %c1 = arith.constant 1 : index
    %c0_2 = arith.constant 0 : index
    %c0_3 = arith.constant 0 : index
    %2 = vector.load %arg1[%c1, %c0_2, %c0_3] : memref<2x16x128xf32, #tpu.memory_space<vmem>>, vector<1x16x128xf32>
    %3 = vector.shape_cast %2 : vector<1x16x128xf32> to vector<16x128xf32>
    %cst = arith.constant dense<0xFF800000> : vector<128xf32>
    %4 = vector.multi_reduction <maximumf>, %1, %cst [0] : vector<16x128xf32> to vector<128xf32>
    %5 = vector.shape_cast %4 : vector<128xf32> to vector<1x128xf32>
    %6 = vector.broadcast %5 : vector<1x128xf32> to vector<16x128xf32>
    %7 = arith.subf %1, %6 : vector<16x128xf32>
    %cst_4 = arith.constant 5.000000e-01 : f32
    %8 = vector.broadcast %cst_4 : f32 to vector<16x128xf32>
    %9 = arith.mulf %7, %8 : vector<16x128xf32>
    %cst_5 = arith.constant dense<0xFF800000> : vector<128xf32>
    %10 = vector.multi_reduction <maximumf>, %3, %cst_5 [0] : vector<16x128xf32> to vector<128xf32>
    %11 = vector.shape_cast %10 : vector<128xf32> to vector<1x128xf32>
    %12 = vector.broadcast %11 : vector<1x128xf32> to vector<16x128xf32>
    %13 = arith.subf %3, %12 : vector<16x128xf32>
    %cst_6 = arith.constant 5.000000e-01 : f32
    %14 = vector.broadcast %cst_6 : f32 to vector<16x128xf32>
    %15 = arith.mulf %13, %14 : vector<16x128xf32>
    %16 = math.exp %15 : vector<16x128xf32>
    %17 = math.exp %9 : vector<16x128xf32>
    %cst_7 = arith.constant dense<0.000000e+00> : vector<128xf32>
    %18 = vector.multi_reduction <add>, %17, %cst_7 [0] : vector<16x128xf32> to vector<128xf32>
    %19 = vector.shape_cast %18 : vector<128xf32> to vector<1x128xf32>
    %cst_8 = arith.constant dense<0.000000e+00> : vector<128xf32>
    %20 = vector.multi_reduction <add>, %16, %cst_8 [0] : vector<16x128xf32> to vector<128xf32>
    %21 = vector.shape_cast %20 : vector<128xf32> to vector<1x128xf32>
    %22 = arith.subf %15, %9 : vector<16x128xf32>
    %23 = arith.mulf %16, %22 : vector<16x128xf32>
    %cst_9 = arith.constant dense<0.000000e+00> : vector<128xf32>
    %24 = vector.multi_reduction <add>, %23, %cst_9 [0] : vector<16x128xf32> to vector<128xf32>
    %25 = vector.shape_cast %24 : vector<128xf32> to vector<1x128xf32>
    %26 = tpu.reciprocal %21 : vector<1x128xf32> -> vector<1x128xf32>
    %27 = arith.mulf %25, %26 : vector<1x128xf32>
    %28 = math.log %19 : vector<1x128xf32>
    %29 = arith.addf %27, %28 : vector<1x128xf32>
    %30 = math.log %21 : vector<1x128xf32>
    %31 = arith.subf %29, %30 : vector<1x128xf32>
    %32 = vector.shape_cast %31 : vector<1x128xf32> to vector<1x1x128xf32>
    %cst_10 = arith.constant dense<0.000000e+00> : vector<1xf32>
    %33 = vector.multi_reduction <add>, %32, %cst_10 [1, 2] : vector<1x1x128xf32> to vector<1xf32>
    %34 = vector.shape_cast %33 : vector<1xf32> to vector<1x1x1xf32>
    %35 = vector.extract %34[0, 0, 0] : f32 from vector<1x1x1xf32>
    %36 = vector.broadcast %35 : f32 to vector<1x128xf32>
    %c0_11 = arith.constant 0 : index
    %c0_12 = arith.constant 0 : index
    %37 = vector.load %arg2[%c0_11, %c0_12] : memref<1x128xf32, #tpu.memory_space<vmem>>, vector<1x128xf32>
    tpu.vector_store %arg2[%c0_11, %c0_12], %36 {strides = array<i32>} : memref<1x128xf32, #tpu.memory_space<vmem>>, vector<1x128xf32>,
    return
  }
  func.func @transform_0(%arg0: i32) -> (i32, i32, i32) {
    %c0_i32 = arith.constant 0 : i32
    %c0_i32_0 = arith.constant 0 : i32
    %c0_i32_1 = arith.constant 0 : i32
    return %c0_i32, %c0_i32_0, %arg0 : i32, i32, i32
  }
  func.func @transform_1(%arg0: i32) -> (i32, i32) {
    %c0_i32 = arith.constant 0 : i32
    %c0_i32_0 = arith.constant 0 : i32
    return %arg0, %c0_i32 : i32, i32
  }
}

</mosaic_0001>

<llo_original>
// kernel: tpu_custom_call.1
$region0: #{tpu_custom_call.1}
  #allocation0 [shape = 'u32[]', space=smem, size = 0x4, offset = 0x4, fixed_abs, tag = 'smem constant byte address 0x4 - core index']
  #allocation1 [shape = 'u32[144,128]{1,0:T(1,128)}', space=vmem, size = 0x12000, scoped, tag = 'internal scratch']
  %s0 = inlined_call_operand.hbm [shape: f32[2,16,128], index: 0, kind: input, shape index: {}]
  %s1 = inlined_call_operand.hbm [shape: f32[1,128], index: 1, kind: output, shape index: {}]
  %s2 = sld [smem:[#allocation0]]
  $region18: #{tpu_custom_call.1} parent=0
    _
  %s4 = ssub.s32 1, %s2
  %s5 = scalar_select 0, %s4, %s2
  $region1: #{tpu_custom_call.1} parent=0
    #allocation2 [shape = 'u8[16384]{0}', space=vmem, size = 0x4000, scoped, tag = 'input window, operand 0, single buffered']
    #allocation3 [shape = 's32[1]{0}', space=sflag, size = 0x4, scoped, tag = 'scoped memory for tpu_custom_call.1']
    #allocation4 [shape = 's32[1]{0}', space=sflag, size = 0x4, scoped, tag = 'scoped memory for tpu_custom_call.1']
    #allocation5 [shape = 'u8[512]{0}', space=vmem, size = 0x400, scoped, tag = 'output window, operand 0, single buffered']
    %6 = vsyncpa [#allocation3], 0
    %7 = vsyncpa [#allocation4], 0
    // Predicated region
    $region2: #{tpu_custom_call.1} parent=1 // pred_check
      _
    $region3: #{tpu_custom_call.1} parent=1 // pred_check_branch
      %9 = sbr.rel (0) target = $region5
    $region4: #{tpu_custom_call.1} parent=1 // pred_region
      %s11 = ssub.s32 512, 512
      %12 = vsyncadd [#allocation3], %s11
      %s13 = sshll.u32 [#allocation2], 4
      %s14 = int_to_ptr.vmem [resolvable:$true] %s13
      %19 = dma.hbm_to_vmem [thread:$0]  %s0, 512, %s14, [#allocation3], 128, 128, 8
    $region5: #{tpu_custom_call.1} parent=1 // pred_fallthru
      _
    // Predicated region
    $region6: #{tpu_custom_call.1} parent=1 // pred_check
      _
    $region7: #{tpu_custom_call.1} parent=1 // pred_check_branch
      %21 = sbr.rel (0) target = $region9
    $region8: #{tpu_custom_call.1} parent=1 // pred_region
      %22 = dma.done [#allocation3], 512
    $region9: #{tpu_custom_call.1} parent=1 // pred_fallthru
      _
    %v23 = vld [vmem:[#allocation2] sm:$0xff]
    %v24 = vld [vmem:[#allocation2 + $0x8] sm:$0xff]
    %s25 = scalar_lea.vmem [#allocation2], 16
    %v26 = vld [vmem:[%s25] sm:$0xff]
    %v27 = vld [vmem:[%s25 + $0x8] sm:$0xff]
    %v28 = vmax.f32 %v23, %v24
    %v29 = vrot.slane %v28, 4
    %v30 = vmax.f32 %v28, %v29
    %v31 = vrot.slane %v30, 2
    %v32 = vmax.f32 %v30, %v31
    %v33 = vrot.slane %v32, 1
    %v34 = vmax.f32 %v32, %v33
    %v35 = vsub.f32 %v23, %v34
    %v36 = vsub.f32 %v24, %v34
    %v37 = vmul.f32 %v35, 0.5
    %v38 = vmul.f32 %v36, 0.5
    %v39 = vmax.f32 %v26, %v27
    %v40 = vrot.slane %v39, 4
    %v41 = vmax.f32 %v39, %v40
    %v42 = vrot.slane %v41, 2
    %v43 = vmax.f32 %v41, %v42
    %v44 = vrot.slane %v43, 1
    %v45 = vmax.f32 %v43, %v44
    %v46 = vsub.f32 %v26, %v45
    %v47 = vsub.f32 %v27, %v45
    %v48 = vmul.f32 %v46, 0.5
    %v49 = vmul.f32 %v47, 0.5
    %v50 = vmul.f32 %v48, 1.442695
    %v51 = vpow.pop %v50
    %v52 = vmul.f32 %v49, 1.442695
    %v53 = vpow.pop %v52
    %v54 = vmul.f32 %v37, 1.442695
    %v55 = vpow.pop %v54
    %v56 = vmul.f32 %v38, 1.442695
    %v57 = vpow.pop %v56
    %v58 = vadd.f32 %v55, %v57
    %v59 = vrot.slane %v58, 4
    %v60 = vadd.f32 %v58, %v59
    %v61 = vrot.slane %v60, 2
    %v62 = vadd.f32 %v60, %v61
    %v63 = vrot.slane %v62, 1
    %v64 = vadd.f32 %v62, %v63
    %v65 = vadd.f32 %v51, %v53
    %v66 = vrot.slane %v65, 4
    %v67 = vadd.f32 %v65, %v66
    %v68 = vrot.slane %v67, 2
    %v69 = vadd.f32 %v67, %v68
    %v70 = vrot.slane %v69, 1
    %v71 = vadd.f32 %v69, %v70
    %v72 = vsub.f32 %v48, %v37
    %v73 = vsub.f32 %v49, %v38
    %v74 = vmul.f32 %v51, %v72
    %v75 = vmul.f32 %v53, %v73
    %v76 = vadd.f32 %v74, %v75
    %v77 = vrot.slane %v76, 4
    %v78 = vadd.f32 %v76, %v77
    %v79 = vrot.slane %v78, 2
    %v80 = vadd.f32 %v78, %v79
    %v81 = vrot.slane %v80, 1
    %v82 = vadd.f32 %v80, %v81
    %v83 = vrcp.pop %v71
    %v84 = vmul.f32 %v82, %v83
    %v85 = vlog2.pop %v64
    %v86 = vmul.f32 %v85, 0.6931472
    %v87 = vadd.f32 %v84, %v86
    %v88 = vlog2.pop %v71
    %v89 = vmul.f32 %v88, 0.6931472
    %v90 = vsub.f32 %v87, %v89
    %vm91 = vcmask 1040384
    %v92 = vsel %vm91, %v90, 0.0
    %93 = vadd.xlane.f32.xlu0 %v92
    %v94 = vpop.xlane.xlu0 %93
    %v95 = vrot.slane %v94, 4
    %v96 = vadd.f32 %v94, %v95
    %v97 = vrot.slane %v96, 2
    %v98 = vadd.f32 %v96, %v97
    %v99 = vrot.slane %v98, 1
    %v100 = vadd.f32 %v98, %v99
    %s101 = vtos %v100
    %v102 = vstv %s101
    %103 = vst [vmem:[#allocation5] sm:$0x1] %v102
    // Predicated region
    $region10: #{tpu_custom_call.1} parent=1 // pred_check
      _
    $region11: #{tpu_custom_call.1} parent=1 // pred_check_branch
      %105 = sbr.rel (0) target = $region13
    $region12: #{tpu_custom_call.1} parent=1 // pred_region
      %s107 = ssub.s32 16, 16
      %108 = vsyncadd [#allocation4], %s107
      %s110 = sshll.u32 [#allocation5], 4
      %s111 = int_to_ptr.vmem [resolvable:$true] %s110
      %113 = dma.vmem_to_hbm [thread:$0]  %s111, 16, %s1, [#allocation4]
    $region13: #{tpu_custom_call.1} parent=1 // pred_fallthru
      _
    // Predicated region
    $region14: #{tpu_custom_call.1} parent=1 // pred_check
      _
    $region15: #{tpu_custom_call.1} parent=1 // pred_check_branch
      %115 = sbr.rel (0) target = $region17
    $region16: #{tpu_custom_call.1} parent=1 // pred_region
      %116 = dma.done [#allocation4], 16
    $region17: #{tpu_custom_call.1} parent=1 // pred_fallthru
      _
    %117 = vsyncpa [#allocation3], 1
    %118 = vsyncpa [#allocation4], 1

</llo_original>
